<compile_context>
chip_gen: v6e
topology: v6e:2x2x1
jax: 0.10.0
libtpu: 0.0.40
codegen_flags: <defaults>
</compile_context>

<pallas_src>
import functools

import jax
import jax.numpy as jnp
from jax import lax
from jax.experimental import pallas as pl
from jax.experimental.pallas import tpu as pltpu


def _round_up(x, m):
    return ((x + m - 1) // m) * m


def _tpu_config():
    """(vmem_capacity_bytes, is_v5e, has_two_tensorcores), with safe fallbacks."""
    kind = ""
    try:
        kind = (jax.devices()[0].device_kind or "").lower()
    except Exception:
        pass
    vmem_cap = 64 * 1024 * 1024  # conservative default (v7x-sized)
    try:
        vmem_cap = int(pltpu.get_tpu_info().vmem_capacity_bytes)
    except Exception:
        pass
    is_v5e = any(t in kind for t in ("v5e", "v5 lite", "v5litepod"))
    two_tc = any(t in kind for t in ("v4", "v5p", "v7", "tpu7"))
    return vmem_cap, is_v5e, two_tc


def _vmem_estimate(block_b, block_c, D, cd_bytes, cos_bytes, wbuf):
    return (2 * block_b * D * cd_bytes               # hidden tile (double buf)
            + wbuf * D * block_c * cd_bytes          # weight stream buffers
            + 2 * block_b * block_c * cos_bytes      # cos_theta tiles
            + 2 * 2 * block_c * 4                    # inv_wn + valid streams
            + 4 * block_b * 4                        # labels + row_loss
            + block_b * D * cd_bytes + 3 * block_b * 4)  # scratch


def _make_amsoftmax_kernel(*, scale, margin, block_c, has_pad, write_cos):
    scale = float(scale)
    sm = float(scale) * float(margin)

    def kernel(h_ref, w_ref, inv_wn_ref, valid_ref, lbl_ref, *rest):
        if write_cos:
            cos_ref, row_loss_ref, hn_scr, m_scr, l_scr, t_scr = rest
        else:
            cos_ref = None
            row_loss_ref, hn_scr, m_scr, l_scr, t_scr = rest

        k = pl.program_id(1)
        nk = pl.num_programs(1)

        # ---- per-batch-tile init (first class tile only) --------------------
        @pl.when(k == 0)
        def _init():
            h = h_ref[...].astype(jnp.float32)            # norm math in f32
            inv_h = lax.rsqrt(jnp.maximum(
                jnp.sum(h * h, axis=1, keepdims=True), 1e-24))
            hn_scr[...] = (h * inv_h).astype(hn_scr.dtype)
            m_scr[...] = jnp.full_like(m_scr, -jnp.inf)
            l_scr[...] = jnp.zeros_like(l_scr)
            t_scr[...] = jnp.zeros_like(t_scr)

        # ---- MXU matmul, f32 accumulation ------------------------------------
        cos = jnp.dot(hn_scr[...], w_ref[...],
                      preferred_element_type=jnp.float32)
        cos = cos * inv_wn_ref[...]                        # hoisted col norms
        if write_cos:
            cos_ref[...] = cos.astype(cos_ref.dtype)

        # ---- additive margin (one select, no one-hot cast/mul) ----------------
        lbl_local = lbl_ref[...] - k * block_c             # (TM, 1) int32
        col = lax.broadcasted_iota(jnp.int32, cos.shape, 1)
        onehot = col == lbl_local                          # (TM, TN) bool
        scaled = scale * cos
        logits = jnp.where(onehot, scaled - sm, scaled)

        # ---- online softmax across class tiles --------------------------------
        # Padded class columns carry logit 0 (zero weight column); logsumexp is
        # shift-invariant, so letting them into the running max is exact, and
        # their contribution to the sum is zeroed with a single streamed 0/1
        # multiply (valid as long as scale*(1+margin) << 85, i.e. any sane scale).
        m_prev = m_scr[...]
        m_new = jnp.maximum(m_prev, jnp.max(logits, axis=1, keepdims=True))
        p = jnp.exp(logits - m_new)
        if has_pad:
            p = p * valid_ref[...]
        l_scr[...] = jnp.exp(m_prev - m_new) * l_scr[...] + jnp.sum(
            p, axis=1, keepdims=True)
        m_scr[...] = m_new
        t_scr[...] = t_scr[...] + jnp.sum(jnp.where(onehot, logits, 0.0),
                                          axis=1, keepdims=True)

        # ---- per-row cross-entropy at the last class tile ----------------------
        @pl.when(k == nk - 1)
        def _finalize():
            row_loss_ref[...] = m_scr[...] + jnp.log(l_scr[...]) - t_scr[...]

    return kernel


def am_softmax_loss(hidden_states, labels, weight, *, scale=30.0, margin=0.3,
                    compute_dtype=jnp.bfloat16, cos_dtype=None,
                    return_cos=True, block_b=None, block_c=None):
    """AM-Softmax forward. hidden_states: (B, D), labels: (B,), weight: (D, C).

    Returns (loss_scalar, cos_theta) matching the PyTorch module; cos_theta is
    None when return_cos=False (loss-only fast path: no (B, C) HBM writeback).
    """
    B, D = hidden_states.shape
    D2, C = weight.shape
    assert D == D2

    vmem_cap, is_v5e, two_tc = _tpu_config()
    # Leave headroom below the chip's physical VMEM; never request > 100 MiB.
    vmem_limit = max(32 * 1024 * 1024,
                     min(vmem_cap * 7 // 8, 100 * 1024 * 1024))

    cd_bytes = jnp.dtype(compute_dtype).itemsize
    cos_out_dtype = jnp.dtype(cos_dtype) if cos_dtype is not None else jnp.dtype(jnp.float32)
    cos_bytes = cos_out_dtype.itemsize if return_cos else 0
    wbuf = 3 if is_v5e else 2

    # ---- tile selection ------------------------------------------------------
    if block_b is None:
        block_b = 512
        if two_tc and B > 8:
            # guarantee >= 2 batch tiles so the "parallel" axis feeds both TCs
            block_b = min(block_b, _round_up(-(-B // 2), 8))
    block_b = min(_round_up(block_b, 8), _round_up(B, 8))
    if block_c is None:
        block_c = 2048
    block_c = min(_round_up(block_c, 128), _round_up(C, 128))

    budget = int(vmem_limit * 0.9)
    while (_vmem_estimate(block_b, block_c, D, cd_bytes, cos_bytes, wbuf) > budget
           and block_c > 128):
        block_c = max(128, _round_up(block_c // 2, 128))
    while (_vmem_estimate(block_b, block_c, D, cd_bytes, cos_bytes, wbuf) > budget
           and block_b > 8):
        block_b = max(8, _round_up(block_b // 2, 8))

    B_pad = _round_up(B, block_b)
    C_pad = _round_up(C, block_c)
    grid = (B_pad // block_b, C_pad // block_c)
    has_pad = C_pad != C

    # ---- host-side prep (one f32 pass over W for the column norms) ------------
    w_f32 = weight.astype(jnp.float32)
    inv_wn = lax.rsqrt(jnp.maximum(
        jnp.sum(w_f32 * w_f32, axis=0, keepdims=True), 1e-24))        # (1, C)
    valid = (jnp.arange(C_pad, dtype=jnp.int32) < C).astype(jnp.float32)
    valid = valid.reshape(1, C_pad)

    h_in = hidden_states.astype(compute_dtype)          # halves hidden DMA
    w_in = weight.astype(compute_dtype)
    lbl = labels.reshape(-1).astype(jnp.int32)          # labels.flatten()
    if B_pad != B:
        h_in = jnp.pad(h_in, ((0, B_pad - B), (0, 0)))
        lbl = jnp.pad(lbl, (0, B_pad - B))
    if has_pad:
        w_in = jnp.pad(w_in, ((0, 0), (0, C_pad - C)))
        inv_wn = jnp.pad(inv_wn, ((0, 0), (0, C_pad - C)), constant_values=1.0)
    lbl2d = lbl.reshape(B_pad, 1)

    kernel = _make_amsoftmax_kernel(scale=scale, margin=margin, block_c=block_c,
                                    has_pad=has_pad, write_cos=return_cos)

    # Weight tiles stream; triple-buffer on HBM-bound v5e.
    w_spec = pl.BlockSpec((D, block_c), lambda i, k: (0, k))
    if is_v5e:
        try:
            w_spec = pl.BlockSpec((D, block_c), lambda i, k: (0, k),
                                  pipeline_mode=pl.Buffered(3))
        except TypeError:                                # older jax: double-buffer
            w_spec = pl.BlockSpec((D, block_c), lambda i, k: (0, k))

    in_specs = [
        pl.BlockSpec((block_b, D), lambda i, k: (i, 0)),   # hidden (resident)
        w_spec,                                            # weight (streamed)
        pl.BlockSpec((1, block_c), lambda i, k: (0, k)),   # 1/||w_col||
        pl.BlockSpec((1, block_c), lambda i, k: (0, k)),   # class validity 0/1
        pl.BlockSpec((block_b, 1), lambda i, k: (i, 0)),   # labels
    ]
    row_spec = pl.BlockSpec((block_b, 1), lambda i, k: (i, 0))
    row_shape = jax.ShapeDtypeStruct((B_pad, 1), jnp.float32)
    if return_cos:
        out_shape = (jax.ShapeDtypeStruct((B_pad, C_pad), cos_out_dtype),
                     row_shape)
        out_specs = [pl.BlockSpec((block_b, block_c), lambda i, k: (i, k)),
                     row_spec]
    else:
        out_shape = row_shape
        out_specs = row_spec

    n_btiles = B_pad // block_b
    cost = pl.CostEstimate(
        flops=2 * B_pad * D * C_pad + 8 * B_pad * C_pad,
        transcendentals=B_pad * C_pad,
        bytes_accessed=int(n_btiles * D * C_pad * cd_bytes    # W re-streamed
                           + B_pad * D * cd_bytes             # hidden
                           + B_pad * C_pad * cos_bytes        # cos writeback
                           + n_btiles * 2 * 4 * C_pad         # inv_wn + valid
                           + 8 * B_pad))                      # labels + loss

    result = pl.pallas_call(
        kernel,
        out_shape=out_shape,
        grid_spec=pltpu.PrefetchScalarGridSpec(
            num_scalar_prefetch=0,
            grid=grid,
            in_specs=in_specs,
            out_specs=out_specs,
            scratch_shapes=[
                pltpu.VMEM((block_b, D), compute_dtype),   # normalized hidden
                pltpu.VMEM((block_b, 1), jnp.float32),     # running max
                pltpu.VMEM((block_b, 1), jnp.float32),     # running sum-exp
                pltpu.VMEM((block_b, 1), jnp.float32),     # true-class logit
            ]),
        compiler_params=pltpu.CompilerParams(
            dimension_semantics=("parallel", "arbitrary"),
            vmem_limit_bytes=int(vmem_limit)),
        cost_estimate=cost,
    )(h_in, w_in, inv_wn, valid, lbl2d)

    if return_cos:
        cos_pad, row_loss = result
        cos_theta = cos_pad[:B, :C]
    else:
        row_loss = result
        cos_theta = None
    # Padded batch rows are excluded here; never sum row_loss directly.
    loss = jnp.mean(row_loss[:B, 0])
    return loss, cos_theta


def am_softmax_loss_ref(hidden_states, labels, weight, *, scale=30.0, margin=0.3):
    """Pure-JAX reference mirroring the PyTorch module (f32)."""
    eps = 1e-12
    w = weight / jnp.maximum(jnp.linalg.norm(weight, axis=0, keepdims=True), eps)
    h = hidden_states / jnp.maximum(
        jnp.linalg.norm(hidden_states, axis=1, keepdims=True), eps)
    cos = h @ w
    psi = cos - margin
    onehot = jax.nn.one_hot(labels, weight.shape[1], dtype=jnp.float32)
    logits = scale * jnp.where(onehot.astype(bool), psi, cos)
    logp = jax.nn.log_softmax(logits, axis=-1)
    loss = -jnp.mean(jnp.sum(onehot * logp, axis=-1))
    return loss, cos


if __name__ == "__main__":
    # Small deterministic shapes; C is intentionally not a multiple of 128 so
    # the class-padding path and (with block_c=128) the multi-tile online
    # softmax are exercised.
    B, D, C = 16, 64, 300
    key = jax.random.PRNGKey(0)
    k_h, k_w, k_l = jax.random.split(key, 3)
    hidden_states = jax.random.normal(k_h, (B, D), dtype=jnp.float32)
    weight = jax.random.normal(k_w, (D, C), dtype=jnp.float32)
    labels = jax.random.randint(k_l, (B,), 0, C, dtype=jnp.int32)

    loss_ref_v, cos_ref_v = am_softmax_loss_ref(hidden_states, labels, weight)

    # 1) Exact f32 MXU path, small tiles -> grid (2, 3), padding + multi-tile
    #    online softmax exercised. Tight tolerance vs. the reference.
    loss32, cos32 = am_softmax_loss(hidden_states, labels, weight,
                                    compute_dtype=jnp.float32,
                                    block_b=8, block_c=128)
    jax.block_until_ready((loss32, cos32))
    assert jnp.allclose(loss32, loss_ref_v, atol=1e-3, rtol=1e-3), (loss32, loss_ref_v)
    assert jnp.allclose(cos32, cos_ref_v, atol=1e-3, rtol=1e-3)

    # 2) Default path: bf16 MXU inputs, auto tile / VMEM / generation config.
    loss16, cos16 = am_softmax_loss(hidden_states, labels, weight)
    jax.block_until_ready((loss16, cos16))
    assert jnp.allclose(loss16, loss_ref_v, atol=1e-1, rtol=2e-2), (loss16, loss_ref_v)
    assert jnp.allclose(cos16, cos_ref_v, atol=3e-2)

    # 3) Loss-only fast path: skips the (B, C) cos_theta writeback entirely.
    loss_only, cos_none = am_softmax_loss(hidden_states, labels, weight,
                                          return_cos=False)
    jax.block_until_ready(loss_only)
    assert cos_none is None
    assert jnp.allclose(loss_only, loss_ref_v, atol=1e-1, rtol=2e-2)

    # 4) bf16 cos_theta writeback (halves the largest HBM stream).
    loss_bf, cos_bf = am_softmax_loss(hidden_states, labels, weight,
                                      cos_dtype=jnp.bfloat16)
    jax.block_until_ready((loss_bf, cos_bf))
    assert cos_bf.dtype == jnp.bfloat16
    assert jnp.allclose(cos_bf.astype(jnp.float32), cos_ref_v, atol=3e-2)
    assert jnp.allclose(loss_bf, loss_ref_v, atol=1e-1, rtol=2e-2)

    print("KERNEL_OK")
</pallas_src>

<mosaic_0001>
module attributes {stable_mosaic.version = 11 : i64} {
  func.func @kernel(%arg0: i32, %arg1: i32, %arg2: memref<8x64xf32, #tpu.memory_space<vmem>>, %arg3: memref<64x128xf32, #tpu.memory_space<vmem>>, %arg4: memref<1x128xf32, #tpu.memory_space<vmem>>, %arg5: memref<1x128xf32, #tpu.memory_space<vmem>>, %arg6: memref<8x1xi32, #tpu.memory_space<vmem>>, %arg7: memref<8x128xf32, #tpu.memory_space<vmem>>, %arg8: memref<8x1xf32, #tpu.memory_space<vmem>>, %arg9: memref<8x64xf32, #tpu.memory_space<vmem>>, %arg10: memref<8x1xf32, #tpu.memory_space<vmem>>, %arg11: memref<8x1xf32, #tpu.memory_space<vmem>>, %arg12: memref<8x1xf32, #tpu.memory_space<vmem>>) attributes {dimension_semantics = [#tpu.dimension_semantics<parallel>, #tpu.dimension_semantics<arbitrary>], iteration_bounds = array<i64: 2, 3>, scalar_prefetch = 0 : i64, scratch_operands = 4 : i64, tpu.core_type = #tpu.core_type<tc>, window_params = [{transform_indices = @transform_0, window_bounds = array<i64: 8, 64>}, {transform_indices = @transform_1, window_bounds = array<i64: 64, 128>}, {transform_indices = @transform_2, window_bounds = array<i64: 1, 128>}, {transform_indices = @transform_3, window_bounds = array<i64: 1, 128>}, {transform_indices = @transform_4, window_bounds = array<i64: 8, 1>}, {transform_indices = @transform_5, window_bounds = array<i64: 8, 128>}, {transform_indices = @transform_6, window_bounds = array<i64: 8, 1>}]} {
    %c0_i32 = arith.constant 0 : i32
    %0 = arith.cmpi eq, %arg1, %c0_i32 : i32
    %1 = arith.extui %0 : i1 to i32
    %c0_i32_0 = arith.constant 0 : i32
    %2 = arith.cmpi ne, %1, %c0_i32_0 : i32
    scf.if %2 {
      %c0_31 = arith.constant 0 : index
      %c0_32 = arith.constant 0 : index
      %51 = vector.load %arg2[%c0_31, %c0_32] : memref<8x64xf32, #tpu.memory_space<vmem>>, vector<8x64xf32>
      %52 = arith.mulf %51, %51 : vector<8x64xf32>
      %cst_33 = arith.constant dense<0.000000e+00> : vector<8xf32>
      %53 = vector.multi_reduction <add>, %52, %cst_33 [1] : vector<8x64xf32> to vector<8xf32>
      %54 = vector.shape_cast %53 : vector<8xf32> to vector<8x1xf32>
      %cst_34 = arith.constant 1.000000e-24 : f32
      %55 = vector.broadcast %cst_34 : f32 to vector<8x1xf32>
      %56 = arith.maximumf %54, %55 : vector<8x1xf32>
      %57 = math.rsqrt %56 : vector<8x1xf32>
      %58 = vector.broadcast %57 : vector<8x1xf32> to vector<8x64xf32>
      %59 = arith.mulf %51, %58 : vector<8x64xf32>
      %c0_35 = arith.constant 0 : index
      %c0_36 = arith.constant 0 : index
      %60 = vector.load %arg9[%c0_35, %c0_36] : memref<8x64xf32, #tpu.memory_space<vmem>>, vector<8x64xf32>
      tpu.vector_store %arg9[%c0_35, %c0_36], %59 {strides = array<i32>} : memref<8x64xf32, #tpu.memory_space<vmem>>, vector<8x64xf32>,
      %cst_37 = arith.constant 0xFF800000 : f32
      %61 = vector.broadcast %cst_37 : f32 to vector<8x1xf32>
      %c0_38 = arith.constant 0 : index
      %c0_39 = arith.constant 0 : index
      %62 = vector.load %arg10[%c0_38, %c0_39] : memref<8x1xf32, #tpu.memory_space<vmem>>, vector<8x1xf32>
      tpu.vector_store %arg10[%c0_38, %c0_39], %61 {strides = array<i32>} : memref<8x1xf32, #tpu.memory_space<vmem>>, vector<8x1xf32>,
      %cst_40 = arith.constant 0.000000e+00 : f32
      %63 = vector.broadcast %cst_40 : f32 to vector<8x1xf32>
      %c0_41 = arith.constant 0 : index
      %c0_42 = arith.constant 0 : index
      %64 = vector.load %arg11[%c0_41, %c0_42] : memref<8x1xf32, #tpu.memory_space<vmem>>, vector<8x1xf32>
      tpu.vector_store %arg11[%c0_41, %c0_42], %63 {strides = array<i32>} : memref<8x1xf32, #tpu.memory_space<vmem>>, vector<8x1xf32>,
      %cst_43 = arith.constant 0.000000e+00 : f32
      %65 = vector.broadcast %cst_43 : f32 to vector<8x1xf32>
      %c0_44 = arith.constant 0 : index
      %c0_45 = arith.constant 0 : index
      %66 = vector.load %arg12[%c0_44, %c0_45] : memref<8x1xf32, #tpu.memory_space<vmem>>, vector<8x1xf32>
      tpu.vector_store %arg12[%c0_44, %c0_45], %65 {strides = array<i32>} : memref<8x1xf32, #tpu.memory_space<vmem>>, vector<8x1xf32>,
    } else {
    }
    %c0 = arith.constant 0 : index
    %c0_1 = arith.constant 0 : index
    %3 = vector.load %arg9[%c0, %c0_1] : memref<8x64xf32, #tpu.memory_space<vmem>>, vector<8x64xf32>
    %c0_2 = arith.constant 0 : index
    %c0_3 = arith.constant 0 : index
    %4 = vector.load %arg3[%c0_2, %c0_3] : memref<64x128xf32, #tpu.memory_space<vmem>>, vector<64x128xf32>
    %cst = arith.constant dense<0.000000e+00> : vector<8x128xf32>
    %5 = tpu.matmul %3, %4, %cst {dimension_numbers = #tpu.dot_dimension_numbers<[1], [0], [0], [1], [0, 0, 1, 1], [], []>} : vector<8x64xf32>, vector<64x128xf32>, vector<8x128xf32> -> vector<8x128xf32>
    %c0_4 = arith.constant 0 : index
    %c0_5 = arith.constant 0 : index
    %6 = vector.load %arg4[%c0_4, %c0_5] : memref<1x128xf32, #tpu.memory_space<vmem>>, vector<1x128xf32>
    %7 = vector.broadcast %6 : vector<1x128xf32> to vector<8x128xf32>
    %8 = arith.mulf %5, %7 : vector<8x128xf32>
    %c0_6 = arith.constant 0 : index
    %c0_7 = arith.constant 0 : index
    %9 = vector.load %arg7[%c0_6, %c0_7] : memref<8x128xf32, #tpu.memory_space<vmem>>, vector<8x128xf32>
    tpu.vector_store %arg7[%c0_6, %c0_7], %8 {strides = array<i32>} : memref<8x128xf32, #tpu.memory_space<vmem>>, vector<8x128xf32>,
    %c0_8 = arith.constant 0 : index
    %c0_9 = arith.constant 0 : index
    %10 = vector.load %arg6[%c0_8, %c0_9] : memref<8x1xi32, #tpu.memory_space<vmem>>, vector<8x1xi32>
    %c128_i32 = arith.constant 128 : i32
    %11 = arith.muli %arg1, %c128_i32 : i32
    %12 = vector.broadcast %11 : i32 to vector<8x1xi32>
    %13 = arith.subi %10, %12 : vector<8x1xi32>
    %14 = tpu.iota {dimensions = array<i32: 1>} : vector<8x128xi32>
    %15 = vector.broadcast %13 : vector<8x1xi32> to vector<8x128xi32>
    %16 = arith.cmpi eq, %14, %15 : vector<8x128xi32>
    %cst_10 = arith.constant 3.000000e+01 : f32
    %17 = vector.broadcast %cst_10 : f32 to vector<8x128xf32>
    %18 = arith.mulf %17, %8 : vector<8x128xf32>
    %cst_11 = arith.constant 9.000000e+00 : f32
    %19 = vector.broadcast %cst_11 : f32 to vector<8x128xf32>
    %20 = arith.subf %18, %19 : vector<8x128xf32>
    %21 = arith.select %16, %20, %18 : vector<8x128xi1>, vector<8x128xf32>
    %c0_12 = arith.constant 0 : index
    %c0_13 = arith.constant 0 : index
    %22 = vector.load %arg10[%c0_12, %c0_13] : memref<8x1xf32, #tpu.memory_space<vmem>>, vector<8x1xf32>
    %cst_14 = arith.constant dense<0xFF800000> : vector<8xf32>
    %23 = vector.multi_reduction <maximumf>, %21, %cst_14 [1] : vector<8x128xf32> to vector<8xf32>
    %24 = vector.shape_cast %23 : vector<8xf32> to vector<8x1xf32>
    %25 = arith.maximumf %22, %24 : vector<8x1xf32>
    %26 = vector.broadcast %25 : vector<8x1xf32> to vector<8x128xf32>
    %27 = arith.subf %21, %26 : vector<8x128xf32>
    %28 = math.exp %27 : vector<8x128xf32>
    %c0_15 = arith.constant 0 : index
    %c0_16 = arith.constant 0 : index
    %29 = vector.load %arg5[%c0_15, %c0_16] : memref<1x128xf32, #tpu.memory_space<vmem>>, vector<1x128xf32>
    %30 = vector.broadcast %29 : vector<1x128xf32> to vector<8x128xf32>
    %31 = arith.mulf %28, %30 : vector<8x128xf32>
    %32 = arith.subf %22, %25 : vector<8x1xf32>
    %33 = math.exp %32 : vector<8x1xf32>
    %c0_17 = arith.constant 0 : index
    %c0_18 = arith.constant 0 : index
    %34 = vector.load %arg11[%c0_17, %c0_18] : memref<8x1xf32, #tpu.memory_space<vmem>>, vector<8x1xf32>
    %35 = arith.mulf %33, %34 : vector<8x1xf32>
    %cst_19 = arith.constant dense<0.000000e+00> : vector<8xf32>
    %36 = vector.multi_reduction <add>, %31, %cst_19 [1] : vector<8x128xf32> to vector<8xf32>
    %37 = vector.shape_cast %36 : vector<8xf32> to vector<8x1xf32>
    %38 = arith.addf %35, %37 : vector<8x1xf32>
    %c0_20 = arith.constant 0 : index
    %c0_21 = arith.constant 0 : index
    %39 = vector.load %arg11[%c0_20, %c0_21] : memref<8x1xf32, #tpu.memory_space<vmem>>, vector<8x1xf32>
    tpu.vector_store %arg11[%c0_20, %c0_21], %38 {strides = array<i32>} : memref<8x1xf32, #tpu.memory_space<vmem>>, vector<8x1xf32>,
    %c0_22 = arith.constant 0 : index
    %c0_23 = arith.constant 0 : index
    %40 = vector.load %arg10[%c0_22, %c0_23] : memref<8x1xf32, #tpu.memory_space<vmem>>, vector<8x1xf32>
    tpu.vector_store %arg10[%c0_22, %c0_23], %25 {strides = array<i32>} : memref<8x1xf32, #tpu.memory_space<vmem>>, vector<8x1xf32>,
    %c0_24 = arith.constant 0 : index
    %c0_25 = arith.constant 0 : index
    %41 = vector.load %arg12[%c0_24, %c0_25] : memref<8x1xf32, #tpu.memory_space<vmem>>, vector<8x1xf32>
    %cst_26 = arith.constant 0.000000e+00 : f32
    %42 = vector.broadcast %cst_26 : f32 to vector<8x128xf32>
    %43 = arith.select %16, %21, %42 : vector<8x128xi1>, vector<8x128xf32>
    %cst_27 = arith.constant dense<0.000000e+00> : vector<8xf32>
    %44 = vector.multi_reduction <add>, %43, %cst_27 [1] : vector<8x128xf32> to vector<8xf32>
    %45 = vector.shape_cast %44 : vector<8xf32> to vector<8x1xf32>
    %46 = arith.addf %41, %45 : vector<8x1xf32>
    %c0_28 = arith.constant 0 : index
    %c0_29 = arith.constant 0 : index
    %47 = vector.load %arg12[%c0_28, %c0_29] : memref<8x1xf32, #tpu.memory_space<vmem>>, vector<8x1xf32>
    tpu.vector_store %arg12[%c0_28, %c0_29], %46 {strides = array<i32>} : memref<8x1xf32, #tpu.memory_space<vmem>>, vector<8x1xf32>,
    %c2_i32 = arith.constant 2 : i32
    %48 = arith.cmpi eq, %arg1, %c2_i32 : i32
    %49 = arith.extui %48 : i1 to i32
    %c0_i32_30 = arith.constant 0 : i32
    %50 = arith.cmpi ne, %49, %c0_i32_30 : i32
    scf.if %50 {
      %c0_31 = arith.constant 0 : index
      %c0_32 = arith.constant 0 : index
      %51 = vector.load %arg10[%c0_31, %c0_32] : memref<8x1xf32, #tpu.memory_space<vmem>>, vector<8x1xf32>
      %c0_33 = arith.constant 0 : index
      %c0_34 = arith.constant 0 : index
      %52 = vector.load %arg11[%c0_33, %c0_34] : memref<8x1xf32, #tpu.memory_space<vmem>>, vector<8x1xf32>
      %53 = math.log %52 : vector<8x1xf32>
      %54 = arith.addf %51, %53 : vector<8x1xf32>
      %c0_35 = arith.constant 0 : index
      %c0_36 = arith.constant 0 : index
      %55 = vector.load %arg12[%c0_35, %c0_36] : memref<8x1xf32, #tpu.memory_space<vmem>>, vector<8x1xf32>
      %56 = arith.subf %54, %55 : vector<8x1xf32>
      %c0_37 = arith.constant 0 : index
      %c0_38 = arith.constant 0 : index
      %57 = vector.load %arg8[%c0_37, %c0_38] : memref<8x1xf32, #tpu.memory_space<vmem>>, vector<8x1xf32>
      tpu.vector_store %arg8[%c0_37, %c0_38], %56 {strides = array<i32>} : memref<8x1xf32, #tpu.memory_space<vmem>>, vector<8x1xf32>,
    } else {
    }
    return
  }
  func.func @transform_0(%arg0: i32, %arg1: i32) -> (i32, i32) {
    %c0_i32 = arith.constant 0 : i32
    %c0_i32_0 = arith.constant 0 : i32
    return %arg0, %c0_i32 : i32, i32
  }
  func.func @transform_1(%arg0: i32, %arg1: i32) -> (i32, i32) {
    %c0_i32 = arith.constant 0 : i32
    %c0_i32_0 = arith.constant 0 : i32
    return %c0_i32, %arg1 : i32, i32
  }
  func.func @transform_2(%arg0: i32, %arg1: i32) -> (i32, i32) {
    %c0_i32 = arith.constant 0 : i32
    %c0_i32_0 = arith.constant 0 : i32
    return %c0_i32, %arg1 : i32, i32
  }
  func.func @transform_3(%arg0: i32, %arg1: i32) -> (i32, i32) {
    %c0_i32 = arith.constant 0 : i32
    %c0_i32_0 = arith.constant 0 : i32
    return %c0_i32, %arg1 : i32, i32
  }
  func.func @transform_4(%arg0: i32, %arg1: i32) -> (i32, i32) {
    %c0_i32 = arith.constant 0 : i32
    %c0_i32_0 = arith.constant 0 : i32
    return %arg0, %c0_i32 : i32, i32
  }
  func.func @transform_5(%arg0: i32, %arg1: i32) -> (i32, i32) {
    %c0_i32 = arith.constant 0 : i32
    return %arg0, %arg1 : i32, i32
  }
  func.func @transform_6(%arg0: i32, %arg1: i32) -> (i32, i32) {
    %c0_i32 = arith.constant 0 : i32
    %c0_i32_0 = arith.constant 0 : i32
    return %arg0, %c0_i32 : i32, i32
  }
}

</mosaic_0001>

<llo_original>
// kernel: tpu_custom_call.1
$region0: #{tpu_custom_call.1}
  #allocation0 [shape = 'u32[]', space=smem, size = 0x4, offset = 0x4, fixed_abs, tag = 'smem constant byte address 0x4 - core index']
  #allocation1 [shape = 'u32[144,128]{1,0:T(1,128)}', space=vmem, size = 0x12000, scoped, tag = 'internal scratch']
  #allocation2 [shape = 'f32[8,64]{1,0:T(8,128)}', space=vmem, size = 0x1000, scoped, tag = 'scratch operand']
  #allocation3 [shape = 'f32[8,1]{1,0:T(8,128)}', space=vmem, size = 0x1000, scoped, tag = 'scratch operand']
  #allocation4 [shape = 'f32[8,1]{1,0:T(8,128)}', space=vmem, size = 0x1000, scoped, tag = 'scratch operand']
  #allocation5 [shape = 'f32[8,1]{1,0:T(8,128)}', space=vmem, size = 0x1000, scoped, tag = 'scratch operand']
  %s0 = inlined_call_operand.vmem [shape: f32[16,64], index: 0, kind: input, shape index: {}]
  %s1 = inlined_call_operand.hbm [shape: f32[64,384], index: 1, kind: input, shape index: {}]
  %s2 = inlined_call_operand.vmem [shape: f32[1,384], index: 2, kind: input, shape index: {}]
  %s3 = inlined_call_operand.vmem [shape: f32[1,384], index: 3, kind: input, shape index: {}]
  %s4 = inlined_call_operand.vmem [shape: s32[16,1], index: 4, kind: input, shape index: {}]
  %s5 = inlined_call_operand.hbm [shape: f32[16,384], index: 5, kind: output, shape index: {0}]
  %s6 = inlined_call_operand.vmem [shape: f32[16,1], index: 6, kind: output, shape index: {1}]
  %7 = xla_tuple %s5, %s6
  %s8 = sld [smem:[#allocation0]]
  $region73: #{tpu_custom_call.1} parent=0
    _
  %s10 = ssub.s32 1, %s8
  %s11 = scalar_select 0, %s10, %s8
  $region1: #{tpu_custom_call.1} parent=0
    #allocation6 [shape = 'u8[65536]{0}', space=vmem, size = 0x10000, scoped, tag = 'input window, operand 1']
    #allocation7 [shape = 's32[2]{0}', space=sflag, size = 0x8, scoped, tag = 'scoped memory for tpu_custom_call.1']
    #allocation8 [shape = 's32[2]{0}', space=sflag, size = 0x8, scoped, tag = 'scoped memory for tpu_custom_call.1']
    #allocation9 [shape = 'u8[8192]{0}', space=vmem, size = 0x2000, scoped, tag = 'output window, operand 0']
    %12 = vsyncpa [#allocation7], 0
    %s13 = scalar_lea.sflag [#allocation7], 1
    %14 = vsyncpa %s13, 0
    %15 = vsyncpa [#allocation8], 0
    %s16 = scalar_lea.sflag [#allocation8], 1
    %17 = vsyncpa %s16, 0
    loop: start=0, step=1, limit=8
    $region2: #{tpu_custom_call.1} parent=1 // loop_pre_header
      _
    $region3: #{tpu_custom_call.1} parent=1 // loop_header
      %s19 = sphi 0, %s23
      %p20 = scmp.ge.s32.totalorder %s19, 8
      %s26 = sphi 0, %s38
      %s27 = sphi 0, %s34
      %s28 = sphi 0, %s26
      %s29 = sphi 0, %s27
      %s30 = sphi 0, %s28
      %s31 = sphi 0, %s29
      %s41 = sphi 0, %s43
      %s44 = sphi 0, %s41
      %s45 = sphi 0, %s44
      %s61 = sphi 0, %s45
      %s67 = sphi 0, %s69
      %s70 = sphi 0, %s67
      %s71 = sphi 0, %s70
      %s87 = sphi 0, %s71
      %s93 = sphi 0, %s95
      %s96 = sphi 0, %s93
      %s97 = sphi 0, %s96
      %s113 = sphi 0, %s97
      %s119 = sphi 0, %s121
      %s122 = sphi 0, %s119
      %s123 = sphi 0, %s122
      %s139 = sphi 0, %s123
      %s145 = sphi 0, %s147
      %s148 = sphi 0, %s145
      %s149 = sphi 0, %s148
      %s165 = sphi 0, %s149
      %s173 = sphi 0, %s175
      %s176 = sphi 0, %s173
      %s177 = sphi 0, %s176
      %s193 = sphi 0, %s177
      %s199 = sphi 0, %s201
      %s202 = sphi 0, %s199
      %s203 = sphi 0, %s202
      %s219 = sphi 0, %s203
    $region4: #{tpu_custom_call.1} parent=1 // loop_header_branch
      %22 = sbr.rel (%p20) target = $region8
    $region5: #{tpu_custom_call.1} parent=1 // loop_body
      %s24 = ssub.s32 %s19, 1
      %s25 = ssub.s32 %s19, 2
      %s32 = sadd.s32 1, %s27
      %p33 = scmp.ge.s32.totalorder %s32, 3
      %s34 = scalar_select %p33, 0, %s32
      %s35 = sadd.s32 1, %s26
      %s36 = scalar_select %p33, %s35, %s26
      %p37 = scmp.ge.s32.totalorder %s36, 2
      %s38 = scalar_select %p37, 0, %s36
      %s39 = ssub.s32 %s26, %s38
      %p40 = scmp.eq.s32.totalorder %s39, 0
      %s42 = sadd.s32 %s41, 1
      %s43 = scalar_select %p40, %s41, %s42
      %p46 = pneg %p40
      %p47 = scmp.eq.s32.totalorder %s19, 5
      %p48 = por %p46, %p47
      %p49 = scmp.ne.s32.totalorder %s41, %s44
      %p50 = scmp.eq.s32.totalorder %s19, 0
      %p51 = por %p49, %p50
      %p52 = scmp.ne.s32.totalorder %s41, %s44
      %p53 = scmp.eq.s32.totalorder %s24, 5
      %p54 = por %p52, %p53
      %p55 = scmp.ne.s32.totalorder %s44, %s45
      %p56 = scmp.eq.s32.totalorder %s24, 0
      %p57 = por %p55, %p56
      %p58 = scmp.ne.s32.totalorder %s44, %s45
      %p59 = scmp.eq.s32.totalorder %s25, 5
      %p60 = por %p58, %p59
      %p62 = scmp.ne.s32.totalorder %s45, %s61
      %p63 = scmp.eq.s32.totalorder %s25, 0
      %p64 = por %p62, %p63
      %s65 = ssub.s32 %s27, %s34
      %p66 = scmp.eq.s32.totalorder %s65, 0
      %s68 = sadd.s32 %s67, 1
      %s69 = scalar_select %p66, %s67, %s68
      %p72 = pneg %p66
      %p73 = scmp.eq.s32.totalorder %s19, 5
      %p74 = por %p72, %p73
      %p75 = scmp.ne.s32.totalorder %s67, %s70
      %p76 = scmp.eq.s32.totalorder %s19, 0
      %p77 = por %p75, %p76
      %p78 = scmp.ne.s32.totalorder %s67, %s70
      %p79 = scmp.eq.s32.totalorder %s24, 5
      %p80 = por %p78, %p79
      %p81 = scmp.ne.s32.totalorder %s70, %s71
      %p82 = scmp.eq.s32.totalorder %s24, 0
      %p83 = por %p81, %p82
      %p84 = scmp.ne.s32.totalorder %s70, %s71
      %p85 = scmp.eq.s32.totalorder %s25, 5
      %p86 = por %p84, %p85
      %p88 = scmp.ne.s32.totalorder %s71, %s87
      %p89 = scmp.eq.s32.totalorder %s25, 0
      %p90 = por %p88, %p89
      %s91 = ssub.s32 %s27, %s34
      %p92 = scmp.eq.s32.totalorder %s91, 0
      %s94 = sadd.s32 %s93, 1
      %s95 = scalar_select %p92, %s93, %s94
      %p98 = pneg %p92
      %p99 = scmp.eq.s32.totalorder %s19, 5
      %p100 = por %p98, %p99
      %p101 = scmp.ne.s32.totalorder %s93, %s96
      %p102 = scmp.eq.s32.totalorder %s19, 0
      %p103 = por %p101, %p102
      %p104 = scmp.ne.s32.totalorder %s93, %s96
      %p105 = scmp.eq.s32.totalorder %s24, 5
      %p106 = por %p104, %p105
      %p107 = scmp.ne.s32.totalorder %s96, %s97
      %p108 = scmp.eq.s32.totalorder %s24, 0
      %p109 = por %p107, %p108
      %p110 = scmp.ne.s32.totalorder %s96, %s97
      %p111 = scmp.eq.s32.totalorder %s25, 5
      %p112 = por %p110, %p111
      %p114 = scmp.ne.s32.totalorder %s97, %s113
      %p115 = scmp.eq.s32.totalorder %s25, 0
      %p116 = por %p114, %p115
      %s117 = ssub.s32 %s27, %s34
      %p118 = scmp.eq.s32.totalorder %s117, 0
      %s120 = sadd.s32 %s119, 1
      %s121 = scalar_select %p118, %s119, %s120
      %p124 = pneg %p118
      %p125 = scmp.eq.s32.totalorder %s19, 5
      %p126 = por %p124, %p125
      %p127 = scmp.ne.s32.totalorder %s119, %s122
      %p128 = scmp.eq.s32.totalorder %s19, 0
      %p129 = por %p127, %p128
      %p130 = scmp.ne.s32.totalorder %s119, %s122
      %p131 = scmp.eq.s32.totalorder %s24, 5
      %p132 = por %p130, %p131
      %p133 = scmp.ne.s32.totalorder %s122, %s123
      %p134 = scmp.eq.s32.totalorder %s24, 0
      %p135 = por %p133, %p134
      %p136 = scmp.ne.s32.totalorder %s122, %s123
      %p137 = scmp.eq.s32.totalorder %s25, 5
      %p138 = por %p136, %p137
      %p140 = scmp.ne.s32.totalorder %s123, %s139
      %p141 = scmp.eq.s32.totalorder %s25, 0
      %p142 = por %p140, %p141
      %s143 = ssub.s32 %s26, %s38
      %p144 = scmp.eq.s32.totalorder %s143, 0
      %s146 = sadd.s32 %s145, 1
      %s147 = scalar_select %p144, %s145, %s146
      %p150 = pneg %p144
      %p151 = scmp.eq.s32.totalorder %s19, 5
      %p152 = por %p150, %p151
      %p153 = scmp.ne.s32.totalorder %s145, %s148
      %p154 = scmp.eq.s32.totalorder %s19, 0
      %p155 = por %p153, %p154
      %p156 = scmp.ne.s32.totalorder %s145, %s148
      %p157 = scmp.eq.s32.totalorder %s24, 5
      %p158 = por %p156, %p157
      %p159 = scmp.ne.s32.totalorder %s148, %s149
      %p160 = scmp.eq.s32.totalorder %s24, 0
      %p161 = por %p159, %p160
      %p162 = scmp.ne.s32.totalorder %s148, %s149
      %p163 = scmp.eq.s32.totalorder %s25, 5
      %p164 = por %p162, %p163
      %p166 = scmp.ne.s32.totalorder %s149, %s165
      %p167 = scmp.eq.s32.totalorder %s25, 0
      %p168 = por %p166, %p167
      %s169 = ssub.s32 %s26, %s38
      %s170 = ssub.s32 %s27, %s34
      %s171 = sor.u32 %s169, %s170
      %p172 = scmp.eq.s32.totalorder %s171, 0
      %s174 = sadd.s32 %s173, 1
      %s175 = scalar_select %p172, %s173, %s174
      %p178 = pneg %p172
      %p179 = scmp.eq.s32.totalorder %s19, 5
      %p180 = por %p178, %p179
      %p181 = scmp.ne.s32.totalorder %s173, %s176
      %p182 = scmp.eq.s32.totalorder %s19, 0
      %p183 = por %p181, %p182
      %p184 = scmp.ne.s32.totalorder %s173, %s176
      %p185 = scmp.eq.s32.totalorder %s24, 5
      %p186 = por %p184, %p185
      %p187 = scmp.ne.s32.totalorder %s176, %s177
      %p188 = scmp.eq.s32.totalorder %s24, 0
      %p189 = por %p187, %p188
      %p190 = scmp.ne.s32.totalorder %s176, %s177
      %p191 = scmp.eq.s32.totalorder %s25, 5
      %p192 = por %p190, %p191
      %p194 = scmp.ne.s32.totalorder %s177, %s193
      %p195 = scmp.eq.s32.totalorder %s25, 0
      %p196 = por %p194, %p195
      %s197 = ssub.s32 %s26, %s38
      %p198 = scmp.eq.s32.totalorder %s197, 0
      %s200 = sadd.s32 %s199, 1
      %s201 = scalar_select %p198, %s199, %s200
      %p204 = pneg %p198
      %p205 = scmp.eq.s32.totalorder %s19, 5
      %p206 = por %p204, %p205
      %p207 = scmp.ne.s32.totalorder %s199, %s202
      %p208 = scmp.eq.s32.totalorder %s19, 0
      %p209 = por %p207, %p208
      %p210 = scmp.ne.s32.totalorder %s199, %s202
      %p211 = scmp.eq.s32.totalorder %s24, 5
      %p212 = por %p210, %p211
      %p213 = scmp.ne.s32.totalorder %s202, %s203
      %p214 = scmp.eq.s32.totalorder %s24, 0
      %p215 = por %p213, %p214
      %p216 = scmp.ne.s32.totalorder %s202, %s203
      %p217 = scmp.eq.s32.totalorder %s25, 5
      %p218 = por %p216, %p217
      %p220 = scmp.ne.s32.totalorder %s203, %s219
      %p221 = scmp.eq.s32.totalorder %s25, 0
      %p222 = por %p220, %p221
      %p223 = scmp.le.s32.totalorder 1, %s19
      %p224 = scmp.lt.s32.totalorder %s19, 7
      %p225 = pnand %p223, %p224
      %p226 = pneg %p225
      // Predicated region
      $region9: #{tpu_custom_call.1} parent=5 // pred_check
        _
      $region10: #{tpu_custom_call.1} parent=5 // pred_check_branch
        %228 = sbr.rel (%p225) target = $region12
      $region11: #{tpu_custom_call.1} parent=5 // pred_region
        %s229 = ssub.s32 %s19, 1
      $region12: #{tpu_custom_call.1} parent=5 // pred_fallthru
        _
      %p230 = scmp.lt.s32.totalorder %s19, 6
      // Predicated region
      $region13: #{tpu_custom_call.1} parent=5 // pred_check
        %p231 = pneg %p230
      $region14: #{tpu_custom_call.1} parent=5 // pred_check_branch
        %233 = sbr.rel (%p231) target = $region16
      $region15: #{tpu_custom_call.1} parent=5 // pred_region
        // Predicated region
        $region17: #{tpu_custom_call.1} parent=15 // pred_check
          %p234 = pneg %p51
        $region18: #{tpu_custom_call.1} parent=15 // pred_check_branch
          %236 = sbr.rel (%p234) target = $region20
        $region19: #{tpu_custom_call.1} parent=15 // pred_region
          %p237 = scmp.lt.s32.totalorder %s26, 1
          %s238 = scalar_select %p237, %s26, 1
          %s239 = smul.addr %s238, 8
          %s240 = scalar_lea.vmem %s0, %s239
        $region20: #{tpu_custom_call.1} parent=15 // pred_fallthru
          _
        // Predicated region
        $region21: #{tpu_custom_call.1} parent=15 // pred_check
          %p241 = pneg %p77
        $region22: #{tpu_custom_call.1} parent=15 // pred_check_branch
          %243 = sbr.rel (%p241) target = $region24
        $region23: #{tpu_custom_call.1} parent=15 // pred_region
          %s244 = sand.u32 %s67, 1
          %s245 = scalar_lea.sflag [#allocation7], %s244
          %s246 = sand.u32 %s67, 1
          %s247 = smul.addr %s246, 64
          %s248 = scalar_lea.vmem [#allocation6], %s247
          %s250 = ssub.s32 1024, 1024
          %251 = vsyncadd %s245, %s250
          %s252 = smul.addr %s27, 128
          %s253 = scalar_lea.hbm %s1, %s252
          %s254 = sshll.u32 %s248, 4
          %s255 = int_to_ptr.vmem [resolvable:$true] %s254
          %260 = dma.hbm_to_vmem [thread:$0]  %s253, 1024, %s255, %s245, 384, 128, 8
        $region24: #{tpu_custom_call.1} parent=15 // pred_fallthru
          _
        // Predicated region
        $region25: #{tpu_custom_call.1} parent=15 // pred_check
          %p261 = pneg %p103
        $region26: #{tpu_custom_call.1} parent=15 // pred_check_branch
          %263 = sbr.rel (%p261) target = $region28
        $region27: #{tpu_custom_call.1} parent=15 // pred_region
          %p264 = scmp.lt.s32.totalorder %s27, 2
          %s265 = scalar_select %p264, %s27, 2
          %s266 = scalar_lea.vmem %s2, %s265
        $region28: #{tpu_custom_call.1} parent=15 // pred_fallthru
          _
        // Predicated region
        $region29: #{tpu_custom_call.1} parent=15 // pred_check
          %p267 = pneg %p129
        $region30: #{tpu_custom_call.1} parent=15 // pred_check_branch
          %269 = sbr.rel (%p267) target = $region32
        $region31: #{tpu_custom_call.1} parent=15 // pred_region
          %p270 = scmp.lt.s32.totalorder %s27, 2
          %s271 = scalar_select %p270, %s27, 2
          %s272 = scalar_lea.vmem %s3, %s271
        $region32: #{tpu_custom_call.1} parent=15 // pred_fallthru
          _
        // Predicated region
        $region33: #{tpu_custom_call.1} parent=15 // pred_check
          %p273 = pneg %p155
        $region34: #{tpu_custom_call.1} parent=15 // pred_check_branch
          %275 = sbr.rel (%p273) target = $region36
        $region35: #{tpu_custom_call.1} parent=15 // pred_region
          %p276 = scmp.lt.s32.totalorder %s26, 1
          %s277 = scalar_select %p276, %s26, 1
          %s278 = smul.addr %s277, 8
          %s279 = scalar_lea.vmem %s4, %s278
        $region36: #{tpu_custom_call.1} parent=15 // pred_fallthru
          _
      $region16: #{tpu_custom_call.1} parent=5 // pred_fallthru
        _
      %p280 = scmp.le.s32.totalorder 1, %s19
      %p281 = scmp.lt.s32.totalorder %s19, 7
      %p282 = pnand %p280, %p281
      %p283 = pneg %p282
      // Predicated region
      $region37: #{tpu_custom_call.1} parent=5 // pred_check
        _
      $region38: #{tpu_custom_call.1} parent=5 // pred_check_branch
        %285 = sbr.rel (%p282) target = $region40
      $region39: #{tpu_custom_call.1} parent=5 // pred_region
        %s286 = ssub.s32 %s19, 1
        %s287 = sand.u32 %s70, 1
        %s288 = scalar_lea.sflag [#allocation7], %s287
        %s289 = sand.u32 %s70, 1
        %s290 = smul.addr %s289, 64
        %s291 = scalar_lea.vmem [#allocation6], %s290
        // Predicated region
        $region41: #{tpu_custom_call.1} parent=39 // pred_check
          %p292 = pneg %p83
        $region42: #{tpu_custom_call.1} parent=39 // pred_check_branch
          %294 = sbr.rel (%p292) target = $region44
        $region43: #{tpu_custom_call.1} parent=39 // pred_region
          %295 = dma.done %s288, 1024
        $region44: #{tpu_custom_call.1} parent=39 // pred_fallthru
          _
        %p296 = scmp.lt.s32.totalorder %s28, 1
        %s297 = scalar_select %p296, %s28, 1
        %s298 = smul.addr %s297, 8
        %s299 = scalar_lea.vmem %s0, %s298
        %p300 = pneg %p57
        %p301 = pneg %p54
        %s302 = sand.u32 %s70, 1
        %s303 = scalar_lea.sflag [#allocation7], %s302
        %s304 = sand.u32 %s70, 1
        %s305 = smul.addr %s304, 64
        %s306 = scalar_lea.vmem [#allocation6], %s305
        %p307 = pneg %p83
        %p308 = pneg %p80
        %p309 = scmp.lt.s32.totalorder %s29, 2
        %s310 = scalar_select %p309, %s29, 2
        %s311 = scalar_lea.vmem %s2, %s310
        %p312 = pneg %p109
        %p313 = pneg %p106
        %p314 = scmp.lt.s32.totalorder %s29, 2
        %s315 = scalar_select %p314, %s29, 2
        %s316 = scalar_lea.vmem %s3, %s315
        %p317 = pneg %p135
        %p318 = pneg %p132
        %p319 = scmp.lt.s32.totalorder %s28, 1
        %s320 = scalar_select %p319, %s28, 1
        %s321 = smul.addr %s320, 8
        %s322 = scalar_lea.vmem %s4, %s321
        %p323 = pneg %p161
        %p324 = pneg %p158
        %p325 = pneg %p189
        %p326 = pneg %p186
        %s327 = sand.u32 %s176, 1
        %s328 = scalar_lea.sflag [#allocation8], %s327
        %s329 = sand.u32 %s176, 1
        %s330 = smul.addr %s329, 8
        %s331 = scalar_lea.vmem [#allocation9], %s330
        %p332 = pneg %p215
        %p333 = pneg %p212
        %p334 = scmp.lt.s32.totalorder %s28, 1
        %s335 = scalar_select %p334, %s28, 1
        %s336 = smul.addr %s335, 8
        %s337 = scalar_lea.vmem %s6, %s336
        %p338 = scmp.lt.s32.totalorder %s28, 1
        %s339 = scalar_select %p338, %s28, 1
        %s340 = smul.addr %s339, 8
        %s341 = scalar_lea.vmem %s0, %s340
        %p342 = scmp.lt.s32.totalorder %s29, 2
        %s343 = scalar_select %p342, %s29, 2
        %s344 = scalar_lea.vmem %s2, %s343
        %p345 = scmp.lt.s32.totalorder %s29, 2
        %s346 = scalar_select %p345, %s29, 2
        %s347 = scalar_lea.vmem %s3, %s346
        %p348 = scmp.lt.s32.totalorder %s28, 1
        %s349 = scalar_select %p348, %s28, 1
        %s350 = smul.addr %s349, 8
        %s351 = scalar_lea.vmem %s4, %s350
        %p352 = scmp.lt.s32.totalorder %s28, 1
        %s353 = scalar_select %p352, %s28, 1
        %s354 = smul.addr %s353, 8
        %s355 = scalar_lea.vmem %s6, %s354
        %p356 = scmp.eq.s32.totalorder %s29, 0
        // Predicated region
        $region45: #{tpu_custom_call.1} parent=39 // pred_check
          %p357 = pneg %p356
        $region46: #{tpu_custom_call.1} parent=39 // pred_check_branch
          %359 = sbr.rel (%p357) target = $region48
        $region47: #{tpu_custom_call.1} parent=39 // pred_region
          %v360 = vld [vmem:[%s341] sm:$0xff]
          %v361 = vmul.f32 %v360, %v360
          %vm362 = vcmask 523264
          %v363 = vsel %vm362, %v361, 0.0
          %364 = vadd.xlane.f32.xlu0 %v363
          %v365 = vpop.xlane.xlu0 %364
          %v366 = vmax.f32 %v365, 1e-24
          %v367 = vrsqrt.pop %v366
          %v368 = vmul.f32 %v360, %v367
          %369 = vst.msk [vmem:[#allocation2] sm:$0xff] %vm362, %v368
          %vm370 = vcmask 7168
          %371 = vst.msk [vmem:[#allocation3] sm:$0xff] %vm370, -inf
          %372 = vst.msk [vmem:[#allocation4] sm:$0xff] %vm370, 0.0
          %373 = vst.msk [vmem:[#allocation5] sm:$0xff] %vm370, 0.0
        $region48: #{tpu_custom_call.1} parent=39 // pred_fallthru
          _
        %v374 = vld [vmem:[#allocation2] sm:$0xff]
        %v375 = vld [vmem:[%s291] sm:$0xff]
        %v376 = vld [vmem:[%s291 + $0x8] sm:$0xff]
        %v377 = vld [vmem:[%s291 + $0x10] sm:$0xff]
        %v378 = vld [vmem:[%s291 + $0x18] sm:$0xff]
        %v379 = vld [vmem:[%s291 + $0x20] sm:$0xff]
        %v380 = vld [vmem:[%s291 + $0x28] sm:$0xff]
        %v381 = vld [vmem:[%s291 + $0x30] sm:$0xff]
        %v382 = vld [vmem:[%s291 + $0x38] sm:$0xff]
        %vm383 = vcmask 523264
        %v385 = vsel %vm383, %v374, 0
        %387 = vmatprep.subr.mxu0 0.0
        %388 = vmatpush1.msra.mxu0 0.0
        %389 = vmatprep.subr.mxu0 0.0
        %390 = vmatpush1.msra.mxu0 0.0
        %391 = vmatprep.subr.mxu0 0.0
        %392 = vmatpush1.msra.mxu0 0.0
        %393 = vmatprep.subr.mxu0 0.0
        %394 = vmatpush1.msra.mxu0 0.0
        %395 = vmatprep.subr.mxu0 0.0
        %396 = vmatpush1.msra.mxu0 0.0
        %397 = vmatprep.subr.mxu0 0.0
        %398 = vmatpush1.msra.mxu0 0.0
        %399 = vmatprep.subr.mxu0 0.0
        %400 = vmatpush1.msra.mxu0 0.0
        %401 = vmatprep.subr.mxu0 0.0
        %402 = vmatpush1.msra.mxu0 0.0
        %403 = vmatprep.subr.mxu0 0.0
        %404 = vmatpush1.msra.mxu0 %v382
        %405 = vmatprep.subr.mxu0 0.0
        %406 = vmatpush1.msra.mxu0 %v381
        %407 = vmatprep.subr.mxu0 0.0
        %408 = vmatpush1.msra.mxu0 %v380
        %409 = vmatprep.subr.mxu0 0.0
        %410 = vmatpush1.msra.mxu0 %v379
        %411 = vmatprep.subr.mxu0 0.0
        %412 = vmatpush1.msra.mxu0 %v378
        %413 = vmatprep.subr.mxu0 0.0
        %414 = vmatpush1.msra.mxu0 %v377
        %415 = vmatprep.subr.mxu0 0.0
        %416 = vmatpush1.msra.mxu0 %v376
        %417 = vmatprep.subr.mxu0 0.0
        %418 = vmatpush1.msra.mxu0 %v375
        %419 = vmatprep.subr.mxu0 0.0
        %420 = vmatpush2.msra.mxu0 0.0
        %421 = vmatprep.subr.mxu0 0.0
        %422 = vmatpush2.msra.mxu0 0.0
        %423 = vmatprep.subr.mxu0 0.0
        %424 = vmatpush2.msra.mxu0 0.0
        %425 = vmatprep.subr.mxu0 0.0
        %426 = vmatpush2.msra.mxu0 0.0
        %427 = vmatprep.subr.mxu0 0.0
        %428 = vmatpush2.msra.mxu0 0.0
        %429 = vmatprep.subr.mxu0 0.0
        %430 = vmatpush2.msra.mxu0 0.0
        %431 = vmatprep.subr.mxu0 0.0
        %432 = vmatpush2.msra.mxu0 0.0
        %433 = vmatprep.subr.mxu0 0.0
        %434 = vmatpush2.msra.mxu0 0.0
        %435 = vmatprep.subr.mxu0 0.0
        %436 = vmatpush2.msra.mxu0 0.0
        %437 = vmatprep.subr.mxu0 0.0
        %438 = vmatpush2.msra.mxu0 0.0
        %439 = vmatprep.subr.mxu0 0.0
        %440 = vmatpush2.msra.mxu0 0.0
        %441 = vmatprep.subr.mxu0 0.0
        %442 = vmatpush2.msra.mxu0 0.0
        %443 = vmatprep.subr.mxu0 0.0
        %444 = vmatpush2.msra.mxu0 0.0
        %445 = vmatprep.subr.mxu0 0.0
        %446 = vmatpush2.msra.mxu0 0.0
        %447 = vmatprep.subr.mxu0 0.0
        %448 = vmatpush2.msra.mxu0 0.0
        %449 = vmatprep.subr.mxu0 0.0
        %450 = vmatpush2.msra.mxu0 0.0
        %451 = vmatprep.mubr.f32.mxu0 0.0
        %452 = vmatmul.mubr.f32.gmra.mxu0 %v385
        %v453 = vpop.f32.mrf.mxu0
        %v454 = vadd.f32 0.0, %v453
        %v455 = vpop.f32.mrf.mxu0
        %456 = vdwg.mxu0
        %v457 = vld [vmem:[%s344] sm:$0x1]
        %v459 = vlaneseq
        %v460 = vshrl.u32 %v459, 7
        %v461 = vsub.s32 0, %v460
        %v462 = vrot.slane %v457, %v461
        %v464 = vmul.f32 %v454, %v462
        %465 = vst [vmem:[%s331] sm:$0xff] %v464
        %v466 = vld [vmem:[%s351] sm:$0xff]
        %s467 = smul.u32 %s29, 128
        %v468 = vstv %s467
        %v469 = vsub.s32 %v466, %v468
        %v470 = vlaneseq
        %v471 = vand.u32 %v470, 127
        %472 = vset.pattern.permute.xlu0 0
        %473 = vperm.xlu0 %472, %v469
        %v474 = vpop.permute.xlu0 %473
        %vm475 = vcmp.eq.s32.totalorder %v471, %v474
        %v476 = vmul.f32 %v464, 30.0
        %v477 = vsub.f32 %v476, 9.0
        %v478 = vsel %vm475, %v477, %v476
        %v479 = vld [vmem:[#allocation3] sm:$0xff]
        %480 = vmax.xlane.f32.xlu0 %v478
        %v481 = vpop.xlane.xlu0 %480
        %v482 = vmax.f32 %v479, %v481
        %484 = vset.pattern.permute.xlu0 0
        %485 = vperm.xlu0 %484, %v482
        %v486 = vpop.permute.xlu0 %485
        %v488 = vsub.f32 %v478, %v486
        %v489 = vmul.f32 %v488, 1.442695
        %v490 = vpow.pop %v489
        %v491 = vld [vmem:[%s347] sm:$0x1]
        %v493 = vlaneseq
        %v494 = vshrl.u32 %v493, 7
        %v495 = vsub.s32 0, %v494
        %v496 = vrot.slane %v491, %v495
        %v498 = vmul.f32 %v490, %v496
        %v499 = vsub.f32 %v479, %v482
        %v500 = vmul.f32 %v499, 1.442695
        %v501 = vpow.pop %v500
        %v502 = vld [vmem:[#allocation4] sm:$0xff]
        %v503 = vmul.f32 %v501, %v502
        %504 = vadd.xlane.f32.xlu0 %v498
        %v505 = vpop.xlane.xlu0 %504
        %v506 = vadd.f32 %v503, %v505
        %vm507 = vcmask 7168
        %508 = vst.msk [vmem:[#allocation4] sm:$0xff] %vm507, %v506
        %509 = vst.msk [vmem:[#allocation3] sm:$0xff] %vm507, %v482
        %v510 = vld [vmem:[#allocation5] sm:$0xff]
        %v511 = vsel %vm475, %v477, 0.0
        %512 = vadd.xlane.f32.xlu0 %v511
        %v513 = vpop.xlane.xlu0 %512
        %v514 = vadd.f32 %v510, %v513
        %515 = vst.msk [vmem:[#allocation5] sm:$0xff] %vm507, %v514
        %p516 = scmp.eq.s32.totalorder %s29, 2
        // Predicated region
        $region49: #{tpu_custom_call.1} parent=39 // pred_check
          %p517 = pneg %p516
        $region50: #{tpu_custom_call.1} parent=39 // pred_check_branch
          %519 = sbr.rel (%p517) target = $region52
        $region51: #{tpu_custom_call.1} parent=39 // pred_region
          %v520 = vld [vmem:[#allocation3] sm:$0xff]
          %v521 = vld [vmem:[#allocation4] sm:$0xff]
          %v522 = vlog2.pop %v521
          %v523 = vmul.f32 %v522, 0.6931472
          %v524 = vadd.f32 %v520, %v523
          %v525 = vld [vmem:[#allocation5] sm:$0xff]
          %v526 = vsub.f32 %v524, %v525
          %527 = vst.msk [vmem:[%s355] sm:$0xff] %vm507, %v526
        $region52: #{tpu_custom_call.1} parent=39 // pred_fallthru
          _
        %s528 = sand.u32 %s176, 1
        %s529 = scalar_lea.sflag [#allocation8], %s528
        %s530 = sand.u32 %s176, 1
        %s531 = smul.addr %s530, 8
        %s532 = scalar_lea.vmem [#allocation9], %s531
        %p533 = scmp.lt.s32.totalorder %s28, 1
        %s534 = scalar_select %p533, %s28, 1
        %s535 = smul.addr %s534, 8
        %s536 = scalar_lea.vmem %s6, %s535
        // Predicated region
        $region53: #{tpu_custom_call.1} parent=39 // pred_check
          %p537 = pneg %p186
        $region54: #{tpu_custom_call.1} parent=39 // pred_check_branch
          %539 = sbr.rel (%p537) target = $region56
        $region55: #{tpu_custom_call.1} parent=39 // pred_region
          %s541 = ssub.s32 128, 128
          %542 = vsyncadd %s529, %s541
          %s543 = smul.addr %s28, 3
          %s544 = sadd.s32 %s29, %s543
          %s545 = smul.addr %s544, 128
          %s546 = scalar_lea.hbm %s5, %s545
          %s548 = sshll.u32 %s532, 4
          %s549 = int_to_ptr.vmem [resolvable:$true] %s548
          %551 = dma.vmem_to_hbm [thread:$0]  %s549, 128, %s546, %s529
        $region56: #{tpu_custom_call.1} parent=39 // pred_fallthru
          _
        // Predicated region
        $region57: #{tpu_custom_call.1} parent=39 // pred_check
          %p552 = pneg %p212
        $region58: #{tpu_custom_call.1} parent=39 // pred_check_branch
          %554 = sbr.rel (%p552) target = $region60
        $region59: #{tpu_custom_call.1} parent=39 // pred_region
          _
        $region60: #{tpu_custom_call.1} parent=39 // pred_fallthru
          _
      $region40: #{tpu_custom_call.1} parent=5 // pred_fallthru
        _
      %p555 = scmp.le.s32.totalorder 2, %s19
      // Predicated region
      $region61: #{tpu_custom_call.1} parent=5 // pred_check
        %p556 = pneg %p555
      $region62: #{tpu_custom_call.1} parent=5 // pred_check_branch
        %558 = sbr.rel (%p556) target = $region64
      $region63: #{tpu_custom_call.1} parent=5 // pred_region
        %s559 = ssub.s32 %s19, 2
        // Predicated region
        $region65: #{tpu_custom_call.1} parent=63 // pred_check
          %p560 = pneg %p192
        $region66: #{tpu_custom_call.1} parent=63 // pred_check_branch
          %562 = sbr.rel (%p560) target = $region68
        $region67: #{tpu_custom_call.1} parent=63 // pred_region
          %s563 = sand.u32 %s177, 1
          %s564 = scalar_lea.sflag [#allocation8], %s563
          %s565 = sand.u32 %s177, 1
          %s566 = smul.addr %s565, 8
          %s567 = scalar_lea.vmem [#allocation9], %s566
          %568 = dma.done %s564, 128
        $region68: #{tpu_custom_call.1} parent=63 // pred_fallthru
          _
        // Predicated region
        $region69: #{tpu_custom_call.1} parent=63 // pred_check
          %p569 = pneg %p218
        $region70: #{tpu_custom_call.1} parent=63 // pred_check_branch
          %571 = sbr.rel (%p569) target = $region72
        $region71: #{tpu_custom_call.1} parent=63 // pred_region
          %p572 = scmp.lt.s32.totalorder %s30, 1
          %s573 = scalar_select %p572, %s30, 1
          %s574 = smul.addr %s573, 8
          %s575 = scalar_lea.vmem %s6, %s574
        $region72: #{tpu_custom_call.1} parent=63 // pred_fallthru
          _
      $region64: #{tpu_custom_call.1} parent=5 // pred_fallthru
        _
    $region6: #{tpu_custom_call.1} parent=1 // loop_footer
      %s23 = sadd.s32 1, %s19
    $region7: #{tpu_custom_call.1} parent=1 // loop_footer_branch
      %18 = sbr.rel target = $region3
    $region8: #{tpu_custom_call.1} parent=1 // loop_exit
      _
    %576 = vsyncpa [#allocation7], 1
    %s577 = scalar_lea.sflag [#allocation7], 1
    %578 = vsyncpa %s577, 1
    %579 = vsyncpa [#allocation8], 1
    %s580 = scalar_lea.sflag [#allocation8], 1
    %581 = vsyncpa %s580, 1

</llo_original>
